<compile_context>
chip_gen: v7x
topology: tpu7x:2x2x1
jax: 0.10.0
libtpu: 0.0.40
codegen_flags: <defaults>
</compile_context>

<pallas_src>
import functools
import numpy as np
import jax
import jax.numpy as jnp
from jax.experimental import pallas as pl
from jax.experimental.pallas import tpu as pltpu

_NEG = -1e30    # logit padding: never wins argmax, exp() underflows to 0
_TINY = 1e-12   # reference's tail smoothing constant


def _round_up(a, b):
    return (a + b - 1) // b * b


# ----------------------------- Pallas kernel --------------------------------

def _stats_kernel(v_orig, tgt_ref, x_ref, cls_ref, out_ref):
    """Single pass over logits: all per-row vocab reductions the loss needs.

    Output lanes (per row): 0: argmax (as f32, exact for V < 2^24)
                            1: logsumexp        2: sum_v x
                            3: sum_v cls_v*x_v  4: x[target]
    """
    x = x_ref[...].astype(jnp.float32)                        # (tm, Vp)
    cls = cls_ref[...]                                        # (1, Vp)
    tgt = tgt_ref[...]                                        # (tm, 1) int32
    vp = x.shape[-1]

    col = jax.lax.broadcasted_iota(jnp.int32, x.shape, 1)
    m = jnp.max(x, axis=-1, keepdims=True)
    # first index attaining the max (matches torch .max(1) / np.argmax tie-break)
    amax = jnp.min(jnp.where(x == m, col, vp), axis=-1, keepdims=True)
    logz = m + jnp.log(jnp.sum(jnp.exp(x - m), axis=-1, keepdims=True))

    if vp != v_orig:                                          # mask padded vocab cols
        xm = jnp.where(col < v_orig, x, 0.0)
    else:
        xm = x
    sum_x = jnp.sum(xm, axis=-1, keepdims=True)
    dot_cs = jnp.sum(x * cls, axis=-1, keepdims=True)         # cls padded with 0
    x_tgt = jnp.sum(jnp.where(col == tgt, x, 0.0), axis=-1, keepdims=True)

    # lane-dense packed output: one unmasked store per vreg row-group
    lane = jax.lax.broadcasted_iota(jnp.int32, out_ref.shape, 1)
    out = jnp.where(lane == 0, amax.astype(jnp.float32), 0.0)
    out = jnp.where(lane == 1, logz, out)
    out = jnp.where(lane == 2, sum_x, out)
    out = jnp.where(lane == 3, dot_cs, out)
    out = jnp.where(lane == 4, x_tgt, out)
    out_ref[...] = out


# ----------------------------- Pallas wrapper --------------------------------

def _choose_tm(n, vp, itemsize, budget_bytes=4 << 20):
    """Largest row tile whose x-block stays ~4 MiB (double-buffered it still
    fits the default scoped-VMEM limit on v5e/v6e/v7x), capped at 1024 rows."""
    rows = budget_bytes // max(1, vp * itemsize)
    rows = max(8, min(1024, rows))
    rows = min(rows, _round_up(n, 8))
    rows -= rows % 8
    return max(8, int(rows))


def pallas_row_stats(x, tgt_col, cls_row, v_orig, tm):
    n, vp = x.shape
    g = n // tm
    kernel = functools.partial(_stats_kernel, v_orig)
    return pl.pallas_call(
        kernel,
        out_shape=jax.ShapeDtypeStruct((n, 128), jnp.float32),
        grid=(g,),
        in_specs=[pl.BlockSpec((tm, 1), lambda i: (i, 0)),
                  pl.BlockSpec((tm, vp), lambda i: (i, 0)),
                  pl.BlockSpec((1, vp), lambda i: (0, 0))],
        out_specs=pl.BlockSpec((tm, 128), lambda i: (i, 0)),
        compiler_params=pltpu.CompilerParams(dimension_semantics=("parallel",)),
    )(tgt_col, x, cls_row)


# ----------------------------- Host-side glue --------------------------------

def levenshtein(a, b):
    la, lb = len(a), len(b)
    prev = list(range(lb + 1))
    for i in range(1, la + 1):
        cur = [i] + [0] * lb
        for j in range(1, lb + 1):
            cur[j] = min(prev[j] + 1, cur[j - 1] + 1,
                         prev[j - 1] + (0 if a[i - 1] == b[j - 1] else 1))
        prev = cur
    return prev[lb]


def _xlogy(a):
    a = np.asarray(a, np.float64)
    return np.where(a > 0, a * np.log(np.where(a > 0, a, 1.0)), 0.0)


def _host_finish(tgt, pred_idx, logz, sum_x, dot_cs, x_tgt, padding_idx,
                 alpha, cls_smooth, head_cls, V, batch_size, normalize_length):
    """Finish the loss from per-row scalars (float64, O(N) work)."""
    keep = np.nonzero(tgt != padding_idx)[0]
    t = tgt[keep].astype(np.int64)
    p = pred_idx[keep]
    logz = logz[keep]
    sum_x = sum_x[keep]
    dot_cs = dot_cs[keep]
    x_tgt = x_tgt[keep]
    nk = len(keep)

    ex = np.zeros(nk, np.float64)
    head = np.zeros(nk, bool)
    head_arr = np.asarray(sorted(head_cls))
    i = 0
    for j in np.nonzero(t == 3)[0]:
        d = levenshtein(t[i:j].tolist(), p[i:j].tolist())
        e = 1.0 - (1.0 - alpha) ** (1.0 / d) if d != 0 else _TINY
        ex[i:j] = e
        head[i:j] = np.isin(t[i:j], head_arr)
        i = j + 1
    # rows at target==3 and after the last terminator keep ex == 0 (as in ref)

    cs = np.asarray(cls_smooth, np.float64)
    S1_head = cs.sum()
    S2_head = _xlogy(cs).sum()
    S1_tail = V * _TINY
    S2_tail = V * _TINY * np.log(_TINY)

    scale = ex / (V - 1)
    cs_t = np.where(head, cs[t], _TINY)
    dot = np.where(head, dot_cs, _TINY * sum_x)
    S1 = np.where(head, S1_head, S1_tail)
    S2 = np.where(head, S2_head, S2_tail)

    conf = 1.0 - scale * S1                       # confidence (scatter value)
    sum_td = 1.0 - scale * cs_t                   # sum_v true_dist after scatter
    # sum_v true_dist * log_softmax(x)
    sum_td_logp = scale * dot + (conf - scale * cs_t) * x_tgt - logz * sum_td
    # sum_v xlogy(true_dist)
    logscale = np.log(np.where(scale > 0, scale, 1.0))
    xl = np.where(scale > 0, scale * (S2 + logscale * S1), 0.0)
    xl = xl - _xlogy(scale * cs_t) + _xlogy(conf)

    total = float(np.sum(xl - sum_td_logp))
    denom = nk if normalize_length else batch_size
    return total / denom, nk


class ClassAwareLabelSmoothingV1Pallas:
    def __init__(self, ignore_index=0, alpha=0.0, smooth_tail=0.0,
                 cls_num_list=None, head_cls=None, normalize_length=True):
        self.padding_idx = ignore_index
        self.confidence = 1.0 - alpha
        self.smoothing = alpha
        self.normalize_length = normalize_length
        counts = np.asarray(cls_num_list, dtype=np.float64)
        self.cls_smooth = smooth_tail + (alpha - smooth_tail) * \
            (counts - counts.min()) / (counts.max() - counts.min())
        self.head_cls = list(head_cls)

    def __call__(self, logits, target):
        B = logits.shape[0]
        V = logits.shape[-1]
        x = jnp.reshape(logits, (-1, V))            # keep input dtype (bf16 stays bf16)
        N = x.shape[0]

        # lane-dense vocab (multiple of 128) and row padding to the tile size
        Vp = _round_up(V, 128)
        tm = _choose_tm(N, Vp, np.dtype(x.dtype).itemsize)
        Np = _round_up(N, tm)
        if Vp != V or Np != N:
            x = jnp.pad(x, ((0, Np - N), (0, Vp - V)), constant_values=_NEG)

        tgt_np = np.asarray(jax.device_get(target)).reshape(-1).astype(np.int64)
        tcol = np.zeros((Np, 1), np.int32)
        tcol[:N, 0] = tgt_np
        cls_row = np.zeros((1, Vp), np.float32)
        cls_row[0, :V] = self.cls_smooth.astype(np.float32)

        # single fused pass over the logits
        stats = pallas_row_stats(x, jnp.asarray(tcol), jnp.asarray(cls_row), V, tm)

        # TODO(synk): segmentation at target==3 + Levenshtein edit distance is
        # sequential & data-dependent -> stays on host (the one forced sync).
        st = np.asarray(jax.device_get(stats[:N, :8])).astype(np.float64)
        pred_idx = st[:, 0].astype(np.int64)

        loss, _ = _host_finish(tgt_np, pred_idx, st[:, 1], st[:, 2], st[:, 3],
                               st[:, 4], self.padding_idx, self.smoothing,
                               self.cls_smooth, self.head_cls, V, B,
                               self.normalize_length)
        return jnp.asarray(loss, dtype=jnp.float32)


# ----------------------------- numpy reference ------------------------------

def numpy_reference(logits, target, padding_idx, alpha, cls_smooth, head_cls,
                    normalize_length):
    x = np.asarray(logits, dtype=np.float64).reshape(-1, logits.shape[-1])
    t = np.asarray(target).reshape(-1)
    B = logits.shape[0]
    V = x.shape[-1]
    keep = np.nonzero(t != padding_idx)[0]
    x = x[keep]
    t = t[keep]
    pred_idx = np.argmax(x, axis=1)
    smoothing = np.zeros_like(x)
    i = 0
    for j in np.nonzero(t == 3)[0]:
        d = levenshtein(t[i:j].tolist(), pred_idx[i:j].tolist())
        ex = 1.0 - (1.0 - alpha) ** (1.0 / d) if d != 0 else 1e-12
        cls_sm = np.full((j - i, V), 1e-12)
        for tt in range(j - i):
            if int(t[i + tt]) in head_cls:
                cls_sm[tt, :] = cls_smooth
        smoothing[i:j, :] = ex * cls_sm
        i = j + 1
    true_dist = smoothing / (V - 1)
    conf = 1.0 - true_dist.sum(-1)
    true_dist[np.arange(len(t)), t] = conf
    logp = x - x.max(1, keepdims=True)
    logp = logp - np.log(np.exp(logp).sum(1, keepdims=True))
    kl = np.where(true_dist > 0,
                  true_dist * (np.log(np.where(true_dist > 0, true_dist, 1.0)) - logp),
                  0.0)
    denom = len(t) if normalize_length else B
    return kl.sum() / denom


# ---------------------------------- main -------------------------------------

if __name__ == "__main__":
    B, T, V = 2, 8, 32          # small shapes consistent with (B, T, V) logits
    key = jax.random.PRNGKey(0)
    logits = jax.random.normal(key, (B, T, V), dtype=jnp.float32)

    # deterministic target with padding (0) and segment terminators (3)
    target = jnp.asarray(
        np.array([[0, 5, 1, 7, 3, 2, 9, 3],
                  [4, 1, 3, 0, 6, 2, 8, 3]], dtype=np.int32))

    cls_num_list = (np.arange(V) * 7 + 3).tolist()
    head_cls = [1, 2, 5, 7]
    alpha, smooth_tail = 0.1, 0.01

    loss_mod = ClassAwareLabelSmoothingV1Pallas(
        ignore_index=0, alpha=alpha, smooth_tail=smooth_tail,
        cls_num_list=cls_num_list, head_cls=head_cls, normalize_length=True)

    loss = loss_mod(logits, target)
    loss = jax.block_until_ready(loss)

    ref = numpy_reference(np.asarray(logits), np.asarray(target), 0, alpha,
                          loss_mod.cls_smooth, head_cls, True)
    assert np.allclose(float(loss), ref, rtol=1e-4, atol=1e-4), (float(loss), ref)

    print("KERNEL_OK")
</pallas_src>

<mosaic_0001>
module attributes {stable_mosaic.version = 11 : i64} {
  func.func @_stats_kernel(%arg0: i32, %arg1: memref<16x1xi32, #tpu.memory_space<vmem>>, %arg2: memref<16x128xf32, #tpu.memory_space<vmem>>, %arg3: memref<1x128xf32, #tpu.memory_space<vmem>>, %arg4: memref<16x128xf32, #tpu.memory_space<vmem>>) attributes {dimension_semantics = [#tpu.dimension_semantics<parallel>], iteration_bounds = array<i64: 1>, scalar_prefetch = 0 : i64, scratch_operands = 0 : i64, tpu.core_type = #tpu.core_type<tc>, window_params = [{transform_indices = @transform_0, window_bounds = array<i64: 16, 1>}, {transform_indices = @transform_1, window_bounds = array<i64: 16, 128>}, {pipeline_mode = #tpu.pipeline_mode<synchronous>, transform_indices = @transform_2, window_bounds = array<i64: 1, 128>}, {transform_indices = @transform_3, window_bounds = array<i64: 16, 128>}]} {
    %c0 = arith.constant 0 : index
    %c0_0 = arith.constant 0 : index
    %0 = vector.load %arg2[%c0, %c0_0] : memref<16x128xf32, #tpu.memory_space<vmem>>, vector<16x128xf32>
    %c0_1 = arith.constant 0 : index
    %c0_2 = arith.constant 0 : index
    %1 = vector.load %arg3[%c0_1, %c0_2] : memref<1x128xf32, #tpu.memory_space<vmem>>, vector<1x128xf32>
    %c0_3 = arith.constant 0 : index
    %c0_4 = arith.constant 0 : index
    %2 = vector.load %arg1[%c0_3, %c0_4] : memref<16x1xi32, #tpu.memory_space<vmem>>, vector<16x1xi32>
    %3 = tpu.iota {dimensions = array<i32: 1>} : vector<16x128xi32>
    %cst = arith.constant dense<0xFF800000> : vector<16xf32>
    %4 = vector.multi_reduction <maximumf>, %0, %cst [1] : vector<16x128xf32> to vector<16xf32>
    %5 = vector.shape_cast %4 : vector<16xf32> to vector<16x1xf32>
    %6 = vector.broadcast %5 : vector<16x1xf32> to vector<16x128xf32>
    %7 = arith.cmpf oeq, %0, %6 : vector<16x128xf32>
    %c128_i32 = arith.constant 128 : i32
    %8 = vector.broadcast %c128_i32 : i32 to vector<16x128xi32>
    %9 = arith.select %7, %3, %8 : vector<16x128xi1>, vector<16x128xi32>
    %cst_5 = arith.constant dense<2147483647> : vector<16xi32>
    %10 = vector.multi_reduction <minsi>, %9, %cst_5 [1] : vector<16x128xi32> to vector<16xi32>
    %11 = vector.shape_cast %10 : vector<16xi32> to vector<16x1xi32>
    %12 = vector.broadcast %5 : vector<16x1xf32> to vector<16x128xf32>
    %13 = arith.subf %0, %12 : vector<16x128xf32>
    %14 = math.exp %13 : vector<16x128xf32>
    %cst_6 = arith.constant dense<0.000000e+00> : vector<16xf32>
    %15 = vector.multi_reduction <add>, %14, %cst_6 [1] : vector<16x128xf32> to vector<16xf32>
    %16 = vector.shape_cast %15 : vector<16xf32> to vector<16x1xf32>
    %17 = math.log %16 : vector<16x1xf32>
    %18 = arith.addf %5, %17 : vector<16x1xf32>
    %c32_i32 = arith.constant 32 : i32
    %19 = vector.broadcast %c32_i32 : i32 to vector<16x128xi32>
    %20 = arith.cmpi slt, %3, %19 : vector<16x128xi32>
    %cst_7 = arith.constant 0.000000e+00 : f32
    %21 = vector.broadcast %cst_7 : f32 to vector<16x128xf32>
    %22 = arith.select %20, %0, %21 : vector<16x128xi1>, vector<16x128xf32>
    %cst_8 = arith.constant dense<0.000000e+00> : vector<16xf32>
    %23 = vector.multi_reduction <add>, %22, %cst_8 [1] : vector<16x128xf32> to vector<16xf32>
    %24 = vector.shape_cast %23 : vector<16xf32> to vector<16x1xf32>
    %25 = vector.broadcast %1 : vector<1x128xf32> to vector<16x128xf32>
    %26 = arith.mulf %0, %25 : vector<16x128xf32>
    %cst_9 = arith.constant dense<0.000000e+00> : vector<16xf32>
    %27 = vector.multi_reduction <add>, %26, %cst_9 [1] : vector<16x128xf32> to vector<16xf32>
    %28 = vector.shape_cast %27 : vector<16xf32> to vector<16x1xf32>
    %29 = vector.broadcast %2 : vector<16x1xi32> to vector<16x128xi32>
    %30 = arith.cmpi eq, %3, %29 : vector<16x128xi32>
    %cst_10 = arith.constant 0.000000e+00 : f32
    %31 = vector.broadcast %cst_10 : f32 to vector<16x128xf32>
    %32 = arith.select %30, %0, %31 : vector<16x128xi1>, vector<16x128xf32>
    %cst_11 = arith.constant dense<0.000000e+00> : vector<16xf32>
    %33 = vector.multi_reduction <add>, %32, %cst_11 [1] : vector<16x128xf32> to vector<16xf32>
    %34 = vector.shape_cast %33 : vector<16xf32> to vector<16x1xf32>
    %35 = tpu.iota {dimensions = array<i32: 1>} : vector<16x128xi32>
    %c0_i32 = arith.constant 0 : i32
    %36 = vector.broadcast %c0_i32 : i32 to vector<16x128xi32>
    %37 = arith.cmpi eq, %35, %36 : vector<16x128xi32>
    %38 = arith.sitofp %11 : vector<16x1xi32> to vector<16x1xf32>
    %cst_12 = arith.constant 0.000000e+00 : f32
    %39 = vector.shape_cast %38 : vector<16x1xf32> to vector<16x1xf32>
    %40 = vector.broadcast %39 : vector<16x1xf32> to vector<16x128xf32>
    %41 = vector.broadcast %cst_12 : f32 to vector<16x128xf32>
    %42 = arith.select %37, %40, %41 : vector<16x128xi1>, vector<16x128xf32>
    %c1_i32 = arith.constant 1 : i32
    %43 = vector.broadcast %c1_i32 : i32 to vector<16x128xi32>
    %44 = arith.cmpi eq, %35, %43 : vector<16x128xi32>
    %45 = vector.shape_cast %18 : vector<16x1xf32> to vector<16x1xf32>
    %46 = vector.broadcast %45 : vector<16x1xf32> to vector<16x128xf32>
    %47 = arith.select %44, %46, %42 : vector<16x128xi1>, vector<16x128xf32>
    %c2_i32 = arith.constant 2 : i32
    %48 = vector.broadcast %c2_i32 : i32 to vector<16x128xi32>
    %49 = arith.cmpi eq, %35, %48 : vector<16x128xi32>
    %50 = vector.shape_cast %24 : vector<16x1xf32> to vector<16x1xf32>
    %51 = vector.broadcast %50 : vector<16x1xf32> to vector<16x128xf32>
    %52 = arith.select %49, %51, %47 : vector<16x128xi1>, vector<16x128xf32>
    %c3_i32 = arith.constant 3 : i32
    %53 = vector.broadcast %c3_i32 : i32 to vector<16x128xi32>
    %54 = arith.cmpi eq, %35, %53 : vector<16x128xi32>
    %55 = vector.shape_cast %28 : vector<16x1xf32> to vector<16x1xf32>
    %56 = vector.broadcast %55 : vector<16x1xf32> to vector<16x128xf32>
    %57 = arith.select %54, %56, %52 : vector<16x128xi1>, vector<16x128xf32>
    %c4_i32 = arith.constant 4 : i32
    %58 = vector.broadcast %c4_i32 : i32 to vector<16x128xi32>
    %59 = arith.cmpi eq, %35, %58 : vector<16x128xi32>
    %60 = vector.shape_cast %34 : vector<16x1xf32> to vector<16x1xf32>
    %61 = vector.broadcast %60 : vector<16x1xf32> to vector<16x128xf32>
    %62 = arith.select %59, %61, %57 : vector<16x128xi1>, vector<16x128xf32>
    %c0_13 = arith.constant 0 : index
    %c0_14 = arith.constant 0 : index
    %63 = vector.load %arg4[%c0_13, %c0_14] : memref<16x128xf32, #tpu.memory_space<vmem>>, vector<16x128xf32>
    tpu.vector_store %arg4[%c0_13, %c0_14], %62 {strides = array<i32>} : memref<16x128xf32, #tpu.memory_space<vmem>>, vector<16x128xf32>,
    return
  }
  func.func @transform_0(%arg0: i32) -> (i32, i32) {
    %c0_i32 = arith.constant 0 : i32
    %c0_i32_0 = arith.constant 0 : i32
    return %arg0, %c0_i32 : i32, i32
  }
  func.func @transform_1(%arg0: i32) -> (i32, i32) {
    %c0_i32 = arith.constant 0 : i32
    %c0_i32_0 = arith.constant 0 : i32
    return %arg0, %c0_i32 : i32, i32
  }
  func.func @transform_2(%arg0: i32) -> (i32, i32) {
    %c0_i32 = arith.constant 0 : i32
    %c0_i32_0 = arith.constant 0 : i32
    %c0_i32_1 = arith.constant 0 : i32
    return %c0_i32, %c0_i32_0 : i32, i32
  }
  func.func @transform_3(%arg0: i32) -> (i32, i32) {
    %c0_i32 = arith.constant 0 : i32
    %c0_i32_0 = arith.constant 0 : i32
    return %arg0, %c0_i32 : i32, i32
  }
}

</mosaic_0001>

<llo_original>
// kernel: tpu_custom_call.1
$region0: #{tpu_custom_call.1}
  #allocation0 [shape = 'u32[]', space=smem, size = 0x4, offset = 0x4, fixed_abs, tag = 'smem constant byte address 0x4 - core index']
  #allocation1 [shape = 'u32[144,128]{1,0:T(1,128)}', space=vmem, size = 0x12000, scoped, tag = 'internal scratch']
  %s0 = inlined_call_operand.vmem [shape: s32[16,1], index: 0, kind: input, shape index: {}]
  %s1 = inlined_call_operand.vmem [shape: f32[16,128], index: 1, kind: input, shape index: {}]
  %s2 = inlined_call_operand.vmem [shape: f32[1,128], index: 2, kind: input, shape index: {}]
  %s3 = inlined_call_operand.hbm [shape: f32[16,128], index: 3, kind: output, shape index: {}]
  %s4 = sld [smem:[#allocation0]]
  $region22: #{tpu_custom_call.1} parent=0
    _
  %s6 = ssub.s32 1, %s4
  %s7 = scalar_select 0, %s6, %s4
  $region1: #{tpu_custom_call.1} parent=0
    #allocation2 [shape = 'u8[8192]{0}', space=vmem, size = 0x2000, scoped, tag = 'output window, operand 0, single buffered']
    #allocation3 [shape = 's32[1]{0}', space=sflag, size = 0x4, scoped, tag = 'scoped memory for tpu_custom_call.1']
    %8 = vsyncpa [#allocation3], 0
    // Predicated region
    $region2: #{tpu_custom_call.1} parent=1 // pred_check
      _
    $region3: #{tpu_custom_call.1} parent=1 // pred_check_branch
      %10 = sbr.rel (0) target = $region5
    $region4: #{tpu_custom_call.1} parent=1 // pred_region
      _
    $region5: #{tpu_custom_call.1} parent=1 // pred_fallthru
      _
    // Predicated region
    $region6: #{tpu_custom_call.1} parent=1 // pred_check
      _
    $region7: #{tpu_custom_call.1} parent=1 // pred_check_branch
      %12 = sbr.rel (0) target = $region9
    $region8: #{tpu_custom_call.1} parent=1 // pred_region
      _
    $region9: #{tpu_custom_call.1} parent=1 // pred_fallthru
      _
    // Predicated region
    $region10: #{tpu_custom_call.1} parent=1 // pred_check
      _
    $region11: #{tpu_custom_call.1} parent=1 // pred_check_branch
      %14 = sbr.rel (0) target = $region13
    $region12: #{tpu_custom_call.1} parent=1 // pred_region
      _
    $region13: #{tpu_custom_call.1} parent=1 // pred_fallthru
      _
    %v15 = vld [vmem:[%s1] sm:$0xff]
    %v16 = vld [vmem:[%s1 + $0x8] sm:$0xff]
    %v17 = vld [vmem:[%s2] sm:$0x1]
    %v18 = vld [vmem:[%s0] sm:$0xff]
    %v19 = vld [vmem:[%s0 + $0x8] sm:$0xff]
    %v20 = vlaneseq
    %v21 = vand.u32 %v20, 127
    %22 = vmax.xlane.f32.xlu0 %v15
    %v23 = vpop.xlane.xlu0 %22
    %24 = vmax.xlane.f32.xlu0 %v16
    %v25 = vpop.xlane.xlu0 %24
    %vm26 = vcmp.eq.f32.partialorder %v15, %v23
    %vm27 = vcmp.eq.f32.partialorder %v16, %v25
    %v28 = vsel %vm26, %v21, 128
    %v29 = vsel %vm27, %v21, 128
    %v30 = vand.u32 %v28, 65535
    %v31 = vshra.s32 %v28, 16
    %v32 = vcvt.s32.f32 %v30
    %v33 = vcvt.s32.f32 %v31
    %34 = vmin.xlane.f32.xlu0 %v33
    %v35 = vpop.xlane.xlu0 %34
    %vm36 = vcmp.eq.f32.partialorder %v33, %v35
    %v37 = vsel %vm36, %v32, inf
    %38 = vmin.xlane.f32.xlu0 %v37
    %v39 = vpop.xlane.xlu0 %38
    %v40 = vcvt.f32.s32 %v39
    %v41 = vcvt.f32.s32 %v35
    %v42 = vshll.u32 %v41, 16
    %v43 = vadd.s32 %v42, %v40
    %v44 = vand.u32 %v29, 65535
    %v45 = vshra.s32 %v29, 16
    %v46 = vcvt.s32.f32 %v44
    %v47 = vcvt.s32.f32 %v45
    %48 = vmin.xlane.f32.xlu0 %v47
    %v49 = vpop.xlane.xlu0 %48
    %vm50 = vcmp.eq.f32.partialorder %v47, %v49
    %v51 = vsel %vm50, %v46, inf
    %52 = vmin.xlane.f32.xlu0 %v51
    %v53 = vpop.xlane.xlu0 %52
    %v54 = vcvt.f32.s32 %v53
    %v55 = vcvt.f32.s32 %v49
    %v56 = vshll.u32 %v55, 16
    %v57 = vadd.s32 %v56, %v54
    %v58 = vsub.f32 %v15, %v23
    %v59 = vsub.f32 %v16, %v25
    %v60 = vmul.f32 %v58, 1.442695
    %v61 = vpow.pop %v60
    %v62 = vmul.f32 %v59, 1.442695
    %v63 = vpow.pop %v62
    %64 = vadd.xlane.f32.xlu0 %v61
    %v65 = vpop.xlane.xlu0 %64
    %66 = vadd.xlane.f32.xlu0 %v63
    %v67 = vpop.xlane.xlu0 %66
    %v68 = vlog2.pop %v65
    %v69 = vmul.f32 %v68, 0.6931472
    %v70 = vlog2.pop %v67
    %v71 = vmul.f32 %v70, 0.6931472
    %v72 = vadd.f32 %v23, %v69
    %v73 = vadd.f32 %v25, %v71
    %vm74 = vcmp.lt.s32.totalorder %v21, 32
    %v75 = vsel %vm74, %v15, 0.0
    %v76 = vsel %vm74, %v16, 0.0
    %77 = vadd.xlane.f32.xlu0 %v75
    %v78 = vpop.xlane.xlu0 %77
    %79 = vadd.xlane.f32.xlu0 %v76
    %v80 = vpop.xlane.xlu0 %79
    %v82 = vlaneseq
    %v83 = vshrl.u32 %v82, 7
    %v84 = vsub.s32 0, %v83
    %v85 = vrot.slane %v17, %v84
    %v87 = vmul.f32 %v15, %v85
    %v88 = vmul.f32 %v16, %v85
    %89 = vadd.xlane.f32.xlu0 %v87
    %v90 = vpop.xlane.xlu0 %89
    %91 = vadd.xlane.f32.xlu0 %v88
    %v92 = vpop.xlane.xlu0 %91
    %93 = vset.pattern.permute.xlu0 0
    %94 = vperm.xlu0 %93, %v18
    %v95 = vpop.permute.xlu0 %94
    %96 = vset.pattern.permute.xlu0 0
    %97 = vperm.xlu0 %96, %v19
    %v98 = vpop.permute.xlu0 %97
    %vm99 = vcmp.eq.s32.totalorder %v21, %v95
    %vm100 = vcmp.eq.s32.totalorder %v21, %v98
    %v101 = vsel %vm99, %v15, 0.0
    %v102 = vsel %vm100, %v16, 0.0
    %103 = vadd.xlane.f32.xlu0 %v101
    %v104 = vpop.xlane.xlu0 %103
    %105 = vadd.xlane.f32.xlu0 %v102
    %v106 = vpop.xlane.xlu0 %105
    %vm107 = vcmp.eq.s32.totalorder %v21, 0
    %v108 = vcvt.s32.f32 %v43
    %v109 = vcvt.s32.f32 %v57
    %v110 = vsel %vm107, %v108, 0.0
    %v111 = vsel %vm107, %v109, 0.0
    %vm112 = vcmp.eq.s32.totalorder %v21, 1
    %v113 = vsel %vm112, %v72, %v110
    %v114 = vsel %vm112, %v73, %v111
    %vm115 = vcmp.eq.s32.totalorder %v21, 2
    %v116 = vsel %vm115, %v78, %v113
    %v117 = vsel %vm115, %v80, %v114
    %vm118 = vcmp.eq.s32.totalorder %v21, 3
    %v119 = vsel %vm118, %v90, %v116
    %v120 = vsel %vm118, %v92, %v117
    %vm121 = vcmp.eq.s32.totalorder %v21, 4
    %v122 = vsel %vm121, %v104, %v119
    %v123 = vsel %vm121, %v106, %v120
    %124 = vst [vmem:[#allocation2] sm:$0xff] %v122
    %125 = vst [vmem:[#allocation2 + $0x8] sm:$0xff] %v123
    // Predicated region
    $region14: #{tpu_custom_call.1} parent=1 // pred_check
      _
    $region15: #{tpu_custom_call.1} parent=1 // pred_check_branch
      %127 = sbr.rel (0) target = $region17
    $region16: #{tpu_custom_call.1} parent=1 // pred_region
      %s129 = ssub.s32 256, 256
      %130 = vsyncadd [#allocation3], %s129
      %s131 = sshll.u32 [#allocation2], 4
      %s132 = int_to_ptr.vmem [resolvable:$true] %s131
      %137 = dma.vmem_to_hbm [thread:$0]  %s132, 256, %s3, [#allocation3], 128, 128, 8
    $region17: #{tpu_custom_call.1} parent=1 // pred_fallthru
      _
    // Predicated region
    $region18: #{tpu_custom_call.1} parent=1 // pred_check
      _
    $region19: #{tpu_custom_call.1} parent=1 // pred_check_branch
      %139 = sbr.rel (0) target = $region21
    $region20: #{tpu_custom_call.1} parent=1 // pred_region
      %140 = dma.done [#allocation3], 256
    $region21: #{tpu_custom_call.1} parent=1 // pred_fallthru
      _
    %141 = vsyncpa [#allocation3], 1

</llo_original>
